<compile_context>
chip_gen: v7x
topology: tpu7x:2x2x1
jax: 0.10.0
libtpu: 0.0.40
codegen_flags: <defaults>
</compile_context>

<pallas_src>
import functools

import jax
import jax.numpy as jnp
from jax.experimental import pallas as pl
from jax.experimental.pallas import tpu as pltpu


# ----------------------------------------------------------------------------
# Chip / memory helpers
# ----------------------------------------------------------------------------
@functools.lru_cache(maxsize=None)
def _vmem_limit_bytes():
    """Scoped-VMEM limit with headroom per generation (v7x has only 64 MiB physical)."""
    try:
        cap = int(pltpu.get_tpu_info().vmem_capacity_bytes)
    except Exception:
        cap = 128 * 1024 * 1024
    return min(int(cap * 0.6), 100 * 1024 * 1024)   # ~38 MiB on v7x, ~76 MiB on v5e/v6e


@functools.lru_cache(maxsize=None)
def _default_gemm_tiles():
    """(tm, tn, tk): 128-square tiles on v5e (4x128x128 MXU, small scoped VMEM),
    256-square tiles on v6e/v7x (2x256x256 MXU)."""
    try:
        kind = jax.devices()[0].device_kind.lower()
    except Exception:
        kind = ""
    if "v5 lite" in kind or "v5e" in kind or "v5lite" in kind:
        return 128, 128, 512
    return 256, 256, 512


def _sublane_align(dtype):
    """Min second-to-last block dim: 8 for f32, 16 for bf16, 32 for int8/fp8."""
    return max(8, 32 // jnp.dtype(dtype).itemsize)


def _pick_tile(dim, target, align):
    """Largest multiple of `align` that divides `dim` and is <= target, else full dim."""
    if dim <= target or dim % align != 0:
        return dim
    t = min(target, dim)
    t -= t % align
    while t >= align:
        if dim % t == 0:
            return t
        t -= align
    return dim


# ----------------------------------------------------------------------------
# Linear: y = epilogue(x @ w + b)   with optional fused GELU / residual-add / LayerNorm
# ----------------------------------------------------------------------------
def _make_linear_kernel(activation, has_residual, fuse_ln, eps, k_tiled):
    def epilogue(acc, b_ref, r_ref, g_ref, bta_ref, o_ref):
        acc = acc + b_ref[...].astype(jnp.float32)
        if activation == "gelu":
            # exact (erf) GELU, matching HF BERT's default hidden_act="gelu"
            acc = 0.5 * acc * (1.0 + jax.lax.erf(acc * 0.7071067811865476))
        elif activation == "tanh":
            acc = jnp.tanh(acc)
        if has_residual:
            acc = acc + r_ref[...].astype(jnp.float32)
        if fuse_ln:
            mean = jnp.mean(acc, axis=-1, keepdims=True)
            var = jnp.mean((acc - mean) ** 2, axis=-1, keepdims=True)
            acc = (acc - mean) * jax.lax.rsqrt(var + eps)
            acc = acc * g_ref[...].astype(jnp.float32) + bta_ref[...].astype(jnp.float32)
        o_ref[...] = acc.astype(o_ref.dtype)

    def kernel(*refs):
        if k_tiled:
            acc_ref = refs[-1]
            refs = refs[:-1]
        o_ref = refs[-1]
        ins = refs[:-1]
        x_ref, w_ref, b_ref = ins[0], ins[1], ins[2]
        pos = 3
        r_ref = None
        if has_residual:
            r_ref = ins[pos]
            pos += 1
        g_ref = bta_ref = None
        if fuse_ln:
            g_ref, bta_ref = ins[pos], ins[pos + 1]

        if k_tiled:
            @pl.when(pl.program_id(2) == 0)
            def _():
                acc_ref[...] = jnp.zeros_like(acc_ref)

            # Native-dtype (bf16) operands into the MXU; f32 accumulation.
            acc_ref[...] += jnp.dot(x_ref[...], w_ref[...],
                                    preferred_element_type=jnp.float32)

            @pl.when(pl.program_id(2) == pl.num_programs(2) - 1)
            def _():
                epilogue(acc_ref[...], b_ref, r_ref, g_ref, bta_ref, o_ref)
        else:
            epilogue(jnp.dot(x_ref[...], w_ref[...],
                             preferred_element_type=jnp.float32),
                     b_ref, r_ref, g_ref, bta_ref, o_ref)

    return kernel


def linear(x, w, b, activation=None, residual=None, ln_gamma=None, ln_beta=None,
           eps=1e-12, out_dtype=None):
    """y = fused_epilogue(x @ w + b).  x: [M, K], w: [K, N], b: [N].
    If ln_gamma/ln_beta are given, applies LayerNorm((x@w+b) [+ residual]) in the
    GEMM epilogue (residual-add + LN fused, no extra HBM round trip)."""
    M0, K = x.shape
    K2, N = w.shape
    assert K == K2
    has_residual = residual is not None
    fuse_ln = ln_gamma is not None
    out_dtype = out_dtype or x.dtype
    itemsize = jnp.dtype(x.dtype).itemsize
    w_itemsize = jnp.dtype(w.dtype).itemsize
    tm_t, tn_t, tk_t = _default_gemm_tiles()
    align_m = _sublane_align(x.dtype)
    vmem = _vmem_limit_bytes()

    # Large non-tile-divisible M: pad rows instead of falling back to a full-M block
    # (full-dim fallback is a latent VMEM OOM on v7x's 64 MiB).
    M = M0
    if M > tm_t and M % tm_t != 0:
        pad = (-M) % tm_t
        x = jnp.pad(x, ((0, pad), (0, 0)))
        if has_residual:
            residual = jnp.pad(residual, ((0, pad), (0, 0)))
        M += pad
    tm = _pick_tile(M, tm_t, align_m)

    # Weight-resident mode: whole (K, N) weight stays in VMEM across all M tiles
    # (constant index_map -> DMA'd once). Gate on the per-generation VMEM budget.
    resident_bytes = (2 * K * N * w_itemsize                # weight (double-buffer alloc)
                      + 2 * (tm * K + tm * N) * itemsize    # x / out tiles
                      + 2 * tm * N * itemsize               # optional residual tile
                      + 4 * N * 4)                          # bias / gamma / beta rows
    resident = resident_bytes <= vmem // 2

    flops = 2 * M * N * K
    trans = M * N if activation in ("gelu", "tanh") else 0
    bytes_acc = (M * K + M * N) * itemsize + K * N * w_itemsize + N * 4
    if has_residual:
        bytes_acc += M * N * itemsize
    cost = pl.CostEstimate(flops=flops, transcendentals=trans, bytes_accessed=bytes_acc)

    kernel = _make_linear_kernel(activation, has_residual, fuse_ln, eps,
                                 k_tiled=not resident)

    if resident:
        grid = (M // tm,)
        in_specs = [
            pl.BlockSpec((tm, K), lambda i: (i, 0)),
            pl.BlockSpec((K, N), lambda i: (0, 0)),      # constant -> weight stays resident
            pl.BlockSpec((1, N), lambda i: (0, 0)),
        ]
        args = [x, w, b.reshape(1, N)]
        if has_residual:
            in_specs.append(pl.BlockSpec((tm, N), lambda i: (i, 0)))
            args.append(residual)
        if fuse_ln:
            in_specs += [pl.BlockSpec((1, N), lambda i: (0, 0)),
                         pl.BlockSpec((1, N), lambda i: (0, 0))]
            args += [ln_gamma.reshape(1, N), ln_beta.reshape(1, N)]
        out_spec = pl.BlockSpec((tm, N), lambda i: (i, 0))
        scratch = []
        dim_sem = ("parallel",)
    else:
        tn = N if fuse_ln else _pick_tile(N, tn_t, 128)   # fused LN needs full output rows
        tk = _pick_tile(K, tk_t, 128)
        # TODO(synk): pad/mask K when it is large and not 128-divisible (avoids full-K fallback).
        grid = (M // tm, N // tn, K // tk)
        in_specs = [
            pl.BlockSpec((tm, tk), lambda i, j, k: (i, k)),
            pl.BlockSpec((tk, tn), lambda i, j, k: (k, j)),
            pl.BlockSpec((1, tn), lambda i, j, k: (0, j)),
        ]
        args = [x, w, b.reshape(1, N)]
        if has_residual:
            in_specs.append(pl.BlockSpec((tm, tn), lambda i, j, k: (i, j)))
            args.append(residual)
        if fuse_ln:
            in_specs += [pl.BlockSpec((1, tn), lambda i, j, k: (0, j)),
                         pl.BlockSpec((1, tn), lambda i, j, k: (0, j))]
            args += [ln_gamma.reshape(1, N), ln_beta.reshape(1, N)]
        out_spec = pl.BlockSpec((tm, tn), lambda i, j, k: (i, j))
        scratch = [pltpu.VMEM((tm, tn), jnp.float32)]
        dim_sem = ("parallel", "parallel", "arbitrary")

    out = pl.pallas_call(
        kernel,
        out_shape=jax.ShapeDtypeStruct((M, N), out_dtype),
        grid_spec=pltpu.PrefetchScalarGridSpec(
            num_scalar_prefetch=0,
            grid=grid,
            in_specs=in_specs,
            out_specs=out_spec,
            scratch_shapes=scratch,
        ),
        compiler_params=pltpu.CompilerParams(
            dimension_semantics=dim_sem,
            vmem_limit_bytes=vmem,
        ),
        cost_estimate=cost,
    )(*args)
    return out[:M0] if M != M0 else out


# ----------------------------------------------------------------------------
# Standalone row-tiled LayerNorm (embedding LN only; the encoder LNs are fused above)
# ----------------------------------------------------------------------------
def _layernorm_kernel(x_ref, g_ref, b_ref, o_ref, *, eps):
    x = x_ref[...].astype(jnp.float32)
    mean = jnp.mean(x, axis=-1, keepdims=True)
    var = jnp.mean((x - mean) ** 2, axis=-1, keepdims=True)
    y = (x - mean) * jax.lax.rsqrt(var + eps)
    y = y * g_ref[...].astype(jnp.float32) + b_ref[...].astype(jnp.float32)
    o_ref[...] = y.astype(o_ref.dtype)


def layernorm(x, gamma, beta, eps=1e-12, tm=512):
    M, H = x.shape
    tm = _pick_tile(M, tm, _sublane_align(x.dtype))
    row = pl.BlockSpec((tm, H), lambda i: (i, 0))
    vec = pl.BlockSpec((1, H), lambda i: (0, 0))
    return pl.pallas_call(
        functools.partial(_layernorm_kernel, eps=eps),
        out_shape=jax.ShapeDtypeStruct((M, H), x.dtype),
        grid=(M // tm,),
        in_specs=[row, vec, vec],
        out_specs=row,
        compiler_params=pltpu.CompilerParams(
            dimension_semantics=("parallel",),
            vmem_limit_bytes=_vmem_limit_bytes(),
        ),
    )(x, gamma.reshape(1, H), beta.reshape(1, H))


# ----------------------------------------------------------------------------
# Attention: fused QKV input, grid=(B, q-tiles), head split in-kernel, per-head stores
# ----------------------------------------------------------------------------
def _attention_kernel(q_ref, kv_ref, m_ref, o_ref, *, num_heads, head_dim, hidden, scale):
    m = m_ref[0].astype(jnp.float32)                               # [1, S] additive mask
    for h in range(num_heads):
        lo = h * head_dim
        qh = q_ref[0, :, lo:lo + head_dim]                         # [tq, dH]  (Q starts at lane 0)
        kh = kv_ref[0, :, hidden + lo:hidden + lo + head_dim]      # [S,  dH]
        vh = kv_ref[0, :, 2 * hidden + lo:2 * hidden + lo + head_dim]
        # contract the shared head dim directly: no kh.T / XLU transpose
        s = jax.lax.dot_general(qh, kh, (((1,), (1,)), ((), ())),
                                preferred_element_type=jnp.float32)        # [tq, S]
        s = s * scale + m
        s = s - jnp.max(s, axis=-1, keepdims=True)
        p = jnp.exp(s)
        p = p * pl.reciprocal(jnp.sum(p, axis=-1, keepdims=True), approx=True)
        ctx = jnp.dot(p.astype(vh.dtype), vh, preferred_element_type=jnp.float32)
        # per-head lane-slab store: no concat, live range bounded to one head
        o_ref[0, :, lo:lo + head_dim] = ctx.astype(o_ref.dtype)


def attention(qkv, mask_add, num_heads, scale):
    """Masked softmax attention on a fused QKV tensor.  qkv: [B, S, 3H]; mask_add: [B, 1, S]."""
    B, S, H3 = qkv.shape
    H = H3 // 3
    head_dim = H // num_heads
    tq = _pick_tile(S, 256, _sublane_align(qkv.dtype))
    # Q rows only need the first H lanes; use a lane-blocked Q spec when H is 128-aligned.
    q_lanes = H if H % 128 == 0 else H3
    kernel = functools.partial(_attention_kernel, num_heads=num_heads,
                               head_dim=head_dim, hidden=H, scale=scale)
    cost = pl.CostEstimate(
        flops=4 * B * num_heads * S * S * head_dim,
        transcendentals=B * num_heads * S * S,
        bytes_accessed=(B * S * H3 + B * S * H) * qkv.dtype.itemsize + B * S * 4,
    )
    return pl.pallas_call(
        kernel,
        out_shape=jax.ShapeDtypeStruct((B, S, H), qkv.dtype),
        grid=(B, S // tq),
        in_specs=[
            pl.BlockSpec((1, tq, q_lanes), lambda b, qi: (b, qi, 0)),   # Q rows (q-tiled)
            pl.BlockSpec((1, S, H3), lambda b, qi: (b, 0, 0)),          # full K/V, constant in qi
            pl.BlockSpec((1, 1, S), lambda b, qi: (b, 0, 0)),           # mask not replicated per head
        ],
        out_specs=pl.BlockSpec((1, tq, H), lambda b, qi: (b, qi, 0)),
        compiler_params=pltpu.CompilerParams(
            dimension_semantics=("parallel", "parallel"),
            vmem_limit_bytes=_vmem_limit_bytes(),
        ),
        cost_estimate=cost,
    )(qkv, qkv, mask_add)


# ----------------------------------------------------------------------------
# Fused pooler (tanh) + dropout(eval)=identity + classifier, lane-padded output
# ----------------------------------------------------------------------------
def _pooler_classifier_kernel(x_ref, wp_ref, bp_ref, wc_ref, bc_ref, o_ref):
    pooled = jnp.tanh(
        jnp.dot(x_ref[...], wp_ref[...], preferred_element_type=jnp.float32)
        + bp_ref[...].astype(jnp.float32))
    # TODO(synk): training-mode dropout (p=dr_rate) would mask `pooled` via pltpu.prng_*;
    # eval/inference dropout is identity, matching nn.Dropout in eval mode.
    logits = (jnp.dot(pooled.astype(wc_ref.dtype), wc_ref[...],
                      preferred_element_type=jnp.float32)
              + bc_ref[...].astype(jnp.float32))
    o_ref[...] = logits.astype(o_ref.dtype)


def pooler_classifier(cls_tok, pool_w, pool_b, cls_w, cls_b, lane=128):
    B, H = cls_tok.shape
    N = cls_w.shape[1]
    Np = ((N + lane - 1) // lane) * lane                  # lane-dense padded output width
    wc = jnp.pad(cls_w, ((0, 0), (0, Np - N)))
    bc = jnp.pad(cls_b, (0, Np - N)).reshape(1, Np)
    out = pl.pallas_call(
        _pooler_classifier_kernel,
        out_shape=jax.ShapeDtypeStruct((B, Np), jnp.float32),   # f32 logits
        grid=(1,),
        in_specs=[
            pl.BlockSpec((B, H), lambda i: (0, 0)),
            pl.BlockSpec((H, H), lambda i: (0, 0)),
            pl.BlockSpec((1, H), lambda i: (0, 0)),
            pl.BlockSpec((H, Np), lambda i: (0, 0)),
            pl.BlockSpec((1, Np), lambda i: (0, 0)),
        ],
        out_specs=pl.BlockSpec((B, Np), lambda i: (0, 0)),
        compiler_params=pltpu.CompilerParams(vmem_limit_bytes=_vmem_limit_bytes()),
    )(cls_tok, pool_w, pool_b.reshape(1, H), wc, bc)
    return out[:, :N]


# ----------------------------------------------------------------------------
# Model (small synthetic "kcbert-base"-style config + classifier head)
# ----------------------------------------------------------------------------
class Config:
    vocab_size = 50
    type_vocab_size = 2
    max_position = 16
    hidden = 32
    num_heads = 4
    intermediate = 64
    num_layers = 2
    num_classes = 8
    dr_rate = 0.5                # dropout rate (identity in eval / inference mode)
    dtype = jnp.bfloat16         # weights + activations; accumulation & LN math stay f32


def init_params(key, cfg):
    dt = cfg.dtype

    def dense(k, fan_in, fan_out):
        kw, _ = jax.random.split(k)
        w = (0.02 * jax.random.normal(kw, (fan_in, fan_out), jnp.float32)).astype(dt)
        b = jnp.zeros((fan_out,), dt)
        return w, b

    keys = jax.random.split(key, 8 + cfg.num_layers)
    p = {}
    p["word_emb"] = (0.02 * jax.random.normal(keys[0], (cfg.vocab_size, cfg.hidden), jnp.float32)).astype(dt)
    p["pos_emb"] = (0.02 * jax.random.normal(keys[1], (cfg.max_position, cfg.hidden), jnp.float32)).astype(dt)
    p["type_emb"] = (0.02 * jax.random.normal(keys[2], (cfg.type_vocab_size, cfg.hidden), jnp.float32)).astype(dt)
    p["emb_ln_g"] = jnp.ones((cfg.hidden,), dt)
    p["emb_ln_b"] = jnp.zeros((cfg.hidden,), dt)

    layers = []
    for li in range(cfg.num_layers):
        lk = jax.random.split(keys[3 + li], 4)
        layer = {}
        # fused Q|K|V projection: one [H, 3H] GEMM per layer
        layer["w_qkv"], layer["b_qkv"] = dense(lk[0], cfg.hidden, 3 * cfg.hidden)
        layer["wo"], layer["bo"] = dense(lk[1], cfg.hidden, cfg.hidden)
        layer["ln1_g"] = jnp.ones((cfg.hidden,), dt)
        layer["ln1_b"] = jnp.zeros((cfg.hidden,), dt)
        layer["wi"], layer["bi"] = dense(lk[2], cfg.hidden, cfg.intermediate)
        layer["wf"], layer["bf"] = dense(lk[3], cfg.intermediate, cfg.hidden)
        layer["ln2_g"] = jnp.ones((cfg.hidden,), dt)
        layer["ln2_b"] = jnp.zeros((cfg.hidden,), dt)
        layers.append(layer)
    p["layers"] = layers

    p["pool_w"], p["pool_b"] = dense(keys[3 + cfg.num_layers], cfg.hidden, cfg.hidden)
    p["cls_w"], p["cls_b"] = dense(keys[4 + cfg.num_layers], cfg.hidden, cfg.num_classes)
    return p


def bert_classifier_forward(params, cfg, input_ids, token_type_ids, attention_mask):
    B, S = input_ids.shape
    H, nH = cfg.hidden, cfg.num_heads
    dH = H // nH
    scale = 1.0 / float(dH) ** 0.5

    # ---- embeddings (gather is plain-JAX glue; LayerNorm is a Pallas kernel) ----
    emb = (params["word_emb"][input_ids]
           + params["pos_emb"][jnp.arange(S)][None, :, :]
           + params["type_emb"][token_type_ids])
    h = layernorm(emb.reshape(B * S, H), params["emb_ln_g"], params["emb_ln_b"])

    # additive attention mask, HF-style: (1 - mask) * -10000, kept at [B, 1, S]
    mask_add = ((1.0 - attention_mask.astype(jnp.float32)) * -10000.0).reshape(B, 1, S)

    for layer in params["layers"]:
        x = h                                                            # [B*S, H]
        # fused Q/K/V projection (one GEMM); fed straight to attention (metadata reshape only)
        qkv = linear(x, layer["w_qkv"], layer["b_qkv"])                  # [B*S, 3H]
        ctx = attention(qkv.reshape(B, S, 3 * H), mask_add, nH, scale).reshape(B * S, H)

        # attention output projection with fused residual-add + LayerNorm epilogue
        h1 = linear(ctx, layer["wo"], layer["bo"],
                    residual=x, ln_gamma=layer["ln1_g"], ln_beta=layer["ln1_b"])

        # FFN: GELU fused in the first GEMM, residual-add + LN fused in the second
        inter = linear(h1, layer["wi"], layer["bi"], activation="gelu")
        h = linear(inter, layer["wf"], layer["bf"],
                   residual=h1, ln_gamma=layer["ln2_g"], ln_beta=layer["ln2_b"])

    # ---- pooler (tanh) + dropout(eval)=identity + classifier, fused into one kernel ----
    cls_tok = h.reshape(B, S, H)[:, 0, :]                                # [B, H]
    logits = pooler_classifier(cls_tok, params["pool_w"], params["pool_b"],
                               params["cls_w"], params["cls_b"])         # [B, num_classes] f32
    return logits


if __name__ == "__main__":
    cfg = Config()
    key = jax.random.PRNGKey(0)
    pkey, ikey, tkey = jax.random.split(key, 3)

    params = init_params(pkey, cfg)

    B, S = 2, 8
    input_ids = jax.random.randint(ikey, (B, S), 0, cfg.vocab_size, dtype=jnp.int32)
    token_type_ids = jax.random.randint(tkey, (B, S), 0, cfg.type_vocab_size, dtype=jnp.int32)
    attention_mask = jnp.ones((B, S), dtype=jnp.int32).at[1, 6:].set(0)   # padded tail on batch 1

    logits = bert_classifier_forward(params, cfg, input_ids, token_type_ids, attention_mask)
    jax.block_until_ready(logits)
    assert logits.shape == (B, cfg.num_classes)
    assert bool(jnp.all(jnp.isfinite(logits)))
    print("KERNEL_OK")
</pallas_src>

<mosaic_0001>
module attributes {stable_mosaic.version = 11 : i64} {
  func.func @_layernorm_kernel(%arg0: i32, %arg1: memref<16x32xbf16, #tpu.memory_space<vmem>>, %arg2: memref<1x32xbf16, #tpu.memory_space<vmem>>, %arg3: memref<1x32xbf16, #tpu.memory_space<vmem>>, %arg4: memref<16x32xbf16, #tpu.memory_space<vmem>>) attributes {dimension_semantics = [#tpu.dimension_semantics<parallel>], iteration_bounds = array<i64: 1>, scalar_prefetch = 0 : i64, scratch_operands = 0 : i64, tpu.core_type = #tpu.core_type<tc>, window_params = [{transform_indices = @transform_0, window_bounds = array<i64: 16, 32>}, {pipeline_mode = #tpu.pipeline_mode<synchronous>, transform_indices = @transform_1, window_bounds = array<i64: 1, 32>}, {pipeline_mode = #tpu.pipeline_mode<synchronous>, transform_indices = @transform_2, window_bounds = array<i64: 1, 32>}, {transform_indices = @transform_3, window_bounds = array<i64: 16, 32>}]} {
    %c0 = arith.constant 0 : index
    %c0_0 = arith.constant 0 : index
    %0 = vector.load %arg1[%c0, %c0_0] : memref<16x32xbf16, #tpu.memory_space<vmem>>, vector<16x32xbf16>
    %1 = arith.extf %0 : vector<16x32xbf16> to vector<16x32xf32>
    %cst = arith.constant dense<0.000000e+00> : vector<16xf32>
    %2 = vector.multi_reduction <add>, %1, %cst [1] : vector<16x32xf32> to vector<16xf32>
    %3 = vector.shape_cast %2 : vector<16xf32> to vector<16x1xf32>
    %cst_1 = arith.constant 3.200000e+01 : f32
    %4 = vector.broadcast %cst_1 : f32 to vector<16x1xf32>
    %5 = arith.divf %3, %4 : vector<16x1xf32>
    %6 = vector.broadcast %5 : vector<16x1xf32> to vector<16x32xf32>
    %7 = arith.subf %1, %6 : vector<16x32xf32>
    %8 = arith.mulf %7, %7 : vector<16x32xf32>
    %cst_2 = arith.constant dense<0.000000e+00> : vector<16xf32>
    %9 = vector.multi_reduction <add>, %8, %cst_2 [1] : vector<16x32xf32> to vector<16xf32>
    %10 = vector.shape_cast %9 : vector<16xf32> to vector<16x1xf32>
    %cst_3 = arith.constant 3.200000e+01 : f32
    %11 = vector.broadcast %cst_3 : f32 to vector<16x1xf32>
    %12 = arith.divf %10, %11 : vector<16x1xf32>
    %13 = vector.broadcast %5 : vector<16x1xf32> to vector<16x32xf32>
    %14 = arith.subf %1, %13 : vector<16x32xf32>
    %cst_4 = arith.constant 9.99999996E-13 : f32
    %15 = vector.broadcast %cst_4 : f32 to vector<16x1xf32>
    %16 = arith.addf %12, %15 : vector<16x1xf32>
    %17 = math.rsqrt %16 : vector<16x1xf32>
    %18 = vector.broadcast %17 : vector<16x1xf32> to vector<16x32xf32>
    %19 = arith.mulf %14, %18 : vector<16x32xf32>
    %c0_5 = arith.constant 0 : index
    %c0_6 = arith.constant 0 : index
    %20 = vector.load %arg2[%c0_5, %c0_6] : memref<1x32xbf16, #tpu.memory_space<vmem>>, vector<1x32xbf16>
    %21 = arith.extf %20 : vector<1x32xbf16> to vector<1x32xf32>
    %22 = vector.broadcast %21 : vector<1x32xf32> to vector<16x32xf32>
    %23 = arith.mulf %19, %22 : vector<16x32xf32>
    %c0_7 = arith.constant 0 : index
    %c0_8 = arith.constant 0 : index
    %24 = vector.load %arg3[%c0_7, %c0_8] : memref<1x32xbf16, #tpu.memory_space<vmem>>, vector<1x32xbf16>
    %25 = arith.extf %24 : vector<1x32xbf16> to vector<1x32xf32>
    %26 = vector.broadcast %25 : vector<1x32xf32> to vector<16x32xf32>
    %27 = arith.addf %23, %26 : vector<16x32xf32>
    %28 = arith.truncf %27 : vector<16x32xf32> to vector<16x32xbf16>
    %c0_9 = arith.constant 0 : index
    %c0_10 = arith.constant 0 : index
    %29 = vector.load %arg4[%c0_9, %c0_10] : memref<16x32xbf16, #tpu.memory_space<vmem>>, vector<16x32xbf16>
    tpu.vector_store %arg4[%c0_9, %c0_10], %28 {strides = array<i32>} : memref<16x32xbf16, #tpu.memory_space<vmem>>, vector<16x32xbf16>,
    return
  }
  func.func @transform_0(%arg0: i32) -> (i32, i32) {
    %c0_i32 = arith.constant 0 : i32
    %c0_i32_0 = arith.constant 0 : i32
    return %arg0, %c0_i32 : i32, i32
  }
  func.func @transform_1(%arg0: i32) -> (i32, i32) {
    %c0_i32 = arith.constant 0 : i32
    %c0_i32_0 = arith.constant 0 : i32
    %c0_i32_1 = arith.constant 0 : i32
    return %c0_i32, %c0_i32_0 : i32, i32
  }
  func.func @transform_2(%arg0: i32) -> (i32, i32) {
    %c0_i32 = arith.constant 0 : i32
    %c0_i32_0 = arith.constant 0 : i32
    %c0_i32_1 = arith.constant 0 : i32
    return %c0_i32, %c0_i32_0 : i32, i32
  }
  func.func @transform_3(%arg0: i32) -> (i32, i32) {
    %c0_i32 = arith.constant 0 : i32
    %c0_i32_0 = arith.constant 0 : i32
    return %arg0, %c0_i32 : i32, i32
  }
}

</mosaic_0001>

<llo_original>
// kernel: tpu_custom_call.1
$region0: #{tpu_custom_call.1}
  #allocation0 [shape = 'u32[]', space=smem, size = 0x4, offset = 0x4, fixed_abs, tag = 'smem constant byte address 0x4 - core index']
  #allocation1 [shape = 'u32[144,128]{1,0:T(1,128)}', space=vmem, size = 0x12000, scoped, tag = 'internal scratch']
  %s0 = inlined_call_operand.hbm [shape: bf16[16,32], index: 0, kind: input, shape index: {}]
  %s1 = inlined_call_operand.hbm [shape: bf16[1,32], index: 1, kind: input, shape index: {}]
  %s2 = inlined_call_operand.hbm [shape: bf16[1,32], index: 2, kind: input, shape index: {}]
  %s3 = inlined_call_operand.hbm [shape: bf16[16,32], index: 3, kind: output, shape index: {}]
  %s4 = sld [smem:[#allocation0]]
  $region34: #{tpu_custom_call.1} parent=0
    _
  %s6 = ssub.s32 1, %s4
  %s7 = scalar_select 0, %s6, %s4
  $region1: #{tpu_custom_call.1} parent=0
    #allocation2 [shape = 'u8[4096]{0}', space=vmem, size = 0x1000, scoped, tag = 'input window, operand 0, single buffered']
    #allocation3 [shape = 's32[1]{0}', space=sflag, size = 0x4, scoped, tag = 'scoped memory for tpu_custom_call.1']
    #allocation4 [shape = 's32[1]{0}', space=sflag, size = 0x4, scoped, tag = 'scoped memory for tpu_custom_call.1']
    #allocation5 [shape = 'u8[512]{0}', space=vmem, size = 0x400, scoped, tag = 'input window, operand 1, single buffered']
    #allocation6 [shape = 's32[1]{0}', space=sflag, size = 0x4, scoped, tag = 'scoped memory for tpu_custom_call.1']
    #allocation7 [shape = 'u8[512]{0}', space=vmem, size = 0x400, scoped, tag = 'input window, operand 2, single buffered']
    #allocation8 [shape = 'u8[4096]{0}', space=vmem, size = 0x1000, scoped, tag = 'output window, operand 0, single buffered']
    %8 = vsyncpa [#allocation3], 0
    %9 = vsyncpa [#allocation6], 0
    %10 = vsyncpa [#allocation4], 0
    // Predicated region
    $region2: #{tpu_custom_call.1} parent=1 // pred_check
      _
    $region3: #{tpu_custom_call.1} parent=1 // pred_check_branch
      %12 = sbr.rel (0) target = $region5
    $region4: #{tpu_custom_call.1} parent=1 // pred_region
      %s14 = ssub.s32 128, 128
      %15 = vsyncadd [#allocation3], %s14
      %s16 = sshll.u32 [#allocation2], 4
      %s17 = int_to_ptr.vmem [resolvable:$true] %s16
      %22 = dma.hbm_to_vmem [thread:$0]  %s0, 128, %s17, [#allocation3], 64, 64, 4
    $region5: #{tpu_custom_call.1} parent=1 // pred_fallthru
      _
    // Predicated region
    $region6: #{tpu_custom_call.1} parent=1 // pred_check
      _
    $region7: #{tpu_custom_call.1} parent=1 // pred_check_branch
      %24 = sbr.rel (0) target = $region9
    $region8: #{tpu_custom_call.1} parent=1 // pred_region
      %s26 = ssub.s32 16, 16
      %27 = vsyncadd [#allocation6], %s26
      %s29 = sshll.u32 [#allocation5], 4
      %s30 = int_to_ptr.vmem [resolvable:$true] %s29
      %32 = dma.hbm_to_vmem [thread:$0]  %s1, 16, %s30, [#allocation6]
    $region9: #{tpu_custom_call.1} parent=1 // pred_fallthru
      _
    // Predicated region
    $region10: #{tpu_custom_call.1} parent=1 // pred_check
      _
    $region11: #{tpu_custom_call.1} parent=1 // pred_check_branch
      %34 = sbr.rel (0) target = $region13
    $region12: #{tpu_custom_call.1} parent=1 // pred_region
      %s36 = ssub.s32 16, 16
      %37 = vsyncadd [#allocation6], %s36
      %s39 = sshll.u32 [#allocation7], 4
      %s40 = int_to_ptr.vmem [resolvable:$true] %s39
      %42 = dma.hbm_to_vmem [thread:$0]  %s2, 16, %s40, [#allocation6]
    $region13: #{tpu_custom_call.1} parent=1 // pred_fallthru
      _
    // Predicated region
    $region14: #{tpu_custom_call.1} parent=1 // pred_check
      _
    $region15: #{tpu_custom_call.1} parent=1 // pred_check_branch
      %44 = sbr.rel (0) target = $region17
    $region16: #{tpu_custom_call.1} parent=1 // pred_region
      %45 = dma.done [#allocation3], 128
    $region17: #{tpu_custom_call.1} parent=1 // pred_fallthru
      _
    // Predicated region
    $region18: #{tpu_custom_call.1} parent=1 // pred_check
      _
    $region19: #{tpu_custom_call.1} parent=1 // pred_check_branch
      %47 = sbr.rel (0) target = $region21
    $region20: #{tpu_custom_call.1} parent=1 // pred_region
      %48 = dma.done [#allocation6], 16
    $region21: #{tpu_custom_call.1} parent=1 // pred_fallthru
      _
    // Predicated region
    $region22: #{tpu_custom_call.1} parent=1 // pred_check
      _
    $region23: #{tpu_custom_call.1} parent=1 // pred_check_branch
      %50 = sbr.rel (0) target = $region25
    $region24: #{tpu_custom_call.1} parent=1 // pred_region
      %51 = dma.done [#allocation6], 16
    $region25: #{tpu_custom_call.1} parent=1 // pred_fallthru
      _
    %v52 = vld [vmem:[#allocation2] sm:$0xf]
    %v53 = vld [vmem:[#allocation2 + $0x4] sm:$0xf]
    %v54 = vunpack.c.l.bf16 %v52
    %v55 = vunpack.c.l.bf16 %v53
    %vm56 = vcmask 261120
    %v57 = vsel %vm56, %v54, 0.0
    %58 = vadd.xlane.f32.xlu0 %v57
    %v59 = vpop.xlane.xlu0 %58
    %v60 = vsel %vm56, %v55, 0.0
    %61 = vadd.xlane.f32.xlu0 %v60
    %v62 = vpop.xlane.xlu0 %61
    %v63 = vrcp.pop 32.0
    %v64 = vmul.f32 %v59, %v63
    %v65 = vmul.f32 %v62, %v63
    %v66 = vsub.f32 %v54, %v64
    %v67 = vsub.f32 %v55, %v65
    %v68 = vmul.f32 %v66, %v66
    %v69 = vmul.f32 %v67, %v67
    %v70 = vsel %vm56, %v68, 0.0
    %71 = vadd.xlane.f32.xlu0 %v70
    %v72 = vpop.xlane.xlu0 %71
    %v73 = vsel %vm56, %v69, 0.0
    %74 = vadd.xlane.f32.xlu0 %v73
    %v75 = vpop.xlane.xlu0 %74
    %v76 = vmul.f32 %v72, %v63
    %v77 = vmul.f32 %v75, %v63
    %v78 = vadd.f32 %v76, 1e-12
    %v79 = vadd.f32 %v77, 1e-12
    %v80 = vrsqrt.pop %v78
    %v81 = vrsqrt.pop %v79
    %v82 = vmul.f32 %v66, %v80
    %v83 = vmul.f32 %v67, %v81
    %v84 = vld [vmem:[#allocation5] sm:$0x1]
    %v85 = vunpack.c.l.bf16 %v84
    %v86 = vlaneseq
    %v87 = vshrl.u32 %v86, 7
    %v88 = vsub.s32 0, %v87
    %v89 = vrot.slane %v85, %v88
    %v90 = vmul.f32 %v82, %v89
    %v91 = vmul.f32 %v83, %v89
    %v92 = vld [vmem:[#allocation7] sm:$0x1]
    %v93 = vunpack.c.l.bf16 %v92
    %v94 = vlaneseq
    %v95 = vshrl.u32 %v94, 7
    %v96 = vsub.s32 0, %v95
    %v97 = vrot.slane %v93, %v96
    %v98 = vadd.f32 %v90, %v97
    %v99 = vadd.f32 %v91, %v97
    %v100 = vpack.c.bf16 %v99, %v98
    %v102 = vunpack.c.l.b16 %v100
    %v103 = vunpack.c.h.b16 %v100
    %v104 = vpack.c.b16 %v102, %v102
    %v105 = vpack.c.b16 %v103, %v103
    %vm108 = vcmask 257024
    %109 = vst.msk [vmem:[#allocation8] sm:$0xf] %vm108, %v104
    %110 = vst.msk [vmem:[#allocation8 + $0x4] sm:$0xf] %vm108, %v105
    // Predicated region
    $region26: #{tpu_custom_call.1} parent=1 // pred_check
      _
    $region27: #{tpu_custom_call.1} parent=1 // pred_check_branch
      %112 = sbr.rel (0) target = $region29
    $region28: #{tpu_custom_call.1} parent=1 // pred_region
      %s114 = ssub.s32 128, 128
      %115 = vsyncadd [#allocation4], %s114
      %s116 = sshll.u32 [#allocation8], 4
      %s117 = int_to_ptr.vmem [resolvable:$true] %s116
      %122 = dma.vmem_to_hbm [thread:$0]  %s117, 128, %s3, [#allocation4], 64, 64, 4
    $region29: #{tpu_custom_call.1} parent=1 // pred_fallthru
      _
    // Predicated region
    $region30: #{tpu_custom_call.1} parent=1 // pred_check
      _
    $region31: #{tpu_custom_call.1} parent=1 // pred_check_branch
      %124 = sbr.rel (0) target = $region33
    $region32: #{tpu_custom_call.1} parent=1 // pred_region
      %125 = dma.done [#allocation4], 128
    $region33: #{tpu_custom_call.1} parent=1 // pred_fallthru
      _
    %126 = vsyncpa [#allocation3], 1
    %127 = vsyncpa [#allocation6], 1
    %128 = vsyncpa [#allocation4], 1

</llo_original>
